<compile_context>
chip_gen: v7x
topology: tpu7x:2x2x1
jax: 0.10.0
libtpu: 0.0.40
codegen_flags: <defaults>
</compile_context>

<pallas_src>
import functools

import jax
import jax.numpy as jnp
from jax.experimental import pallas as pl
from jax.experimental.pallas import tpu as pltpu


def _group_enhance_kernel(x_ref, w_ref, b_ref, o_ref, *,
                          inv_len, inv_len_m1, valid_len):
    # x block: (TB, G, c, Lp) in input dtype; w/b: (1, G, 1, 1) f32.
    xin = x_ref[...]

    # AdaptiveAvgPool1d(1): per-channel mean over l (f32 accumulation, cast
    # fused into the reduction so bf16 inputs keep no full f32 copy live).
    xm = jnp.sum(xin.astype(jnp.float32), axis=3, keepdims=True) * inv_len   # (TB,G,c,1)
    # dot = sum over channels of x * mean(x)                                   (TB,G,1,Lp)
    dot = jnp.sum(xin.astype(jnp.float32) * xm, axis=2, keepdims=True)

    # Normalize over l. torch.std defaults to the unbiased estimator (ddof=1).
    mu = jnp.sum(dot, axis=3, keepdims=True) * inv_len                        # (TB,G,1,1)
    cent = dot - mu
    if valid_len != dot.shape[3]:
        # l was padded to a lane-dense multiple of 128; padded lanes have
        # dot == 0 but cent == -mu, so zero them before the variance.
        lane = jax.lax.broadcasted_iota(jnp.int32, dot.shape, 3)
        cent = jnp.where(lane < valid_len, cent, 0.0)
    var = jnp.sum(cent * cent, axis=3, keepdims=True) * inv_len_m1
    std = jnp.sqrt(var) + 1e-5
    norm = cent * (1.0 / std)                                                 # (TB,G,1,Lp)

    # Per-group affine (broadcast over TB, l) + sigmoid gate. The final
    # multiply stays in the input dtype; only stats are f32.
    gate = jax.nn.sigmoid(norm * w_ref[...] + b_ref[...])
    o_ref[...] = xin * gate.astype(xin.dtype)


def _vmem_budget_bytes():
    """Generation-aware VMEM budget (v5e/v6e: 128 MiB -> 96; v7x: 64 -> 48)."""
    cap = 64 * 1024 * 1024  # conservative default = v7x per-TensorCore VMEM
    try:
        info = pltpu.get_tpu_info()
        cap = int(getattr(info, "vmem_capacity_bytes", cap) or cap)
    except Exception:
        pass
    # Leave ~25% headroom for compiler scratch / semaphores, hard cap 96 MiB.
    return min((cap * 3) // 4, 96 * 1024 * 1024)


def _padded_tile_bytes(sub, lane, itemsize):
    """VMEM footprint of one (sub, lane) tile after (sublane, 128) padding."""
    sub_tile = max(8, 32 // itemsize)            # 8 for f32, 16 for bf16
    return (pl.cdiv(sub, sub_tile) * sub_tile) * (pl.cdiv(lane, 128) * 128) * itemsize


def group_enhance(x, weight, bias, groups=5):
    """x: (B, f, l); weight/bias: (1, groups, 1). Returns (B, f, l) in x.dtype."""
    b, f, l = x.shape
    assert f % groups == 0, f"f={f} must be divisible by groups={groups}"
    assert l > 1, "l must be > 1 (unbiased std uses ddof=1)"
    c = f // groups
    itemsize = x.dtype.itemsize

    # Lane-dense last dim: pad l to a multiple of 128 (unmasked vst on the
    # store side); padded lanes are masked out of the variance in-kernel and
    # sliced off at the end.
    l_pad = pl.cdiv(l, 128) * 128

    x4 = x.reshape(b, groups, c, l)
    if l_pad != l:
        x4 = jnp.pad(x4, ((0, 0), (0, 0), (0, 0), (0, l_pad - l)))
    w = weight.reshape(1, groups, 1, 1).astype(jnp.float32)
    bi = bias.reshape(1, groups, 1, 1).astype(jnp.float32)

    # ---- Block sizing: fill the (generation-aware) VMEM budget. -----------
    # TODO(synk): when c = f//groups < 8 each (c, l) tile pads to 8 sublanes
    # (~2x VMEM); a merged (f, l) layout would avoid it but needs an in-kernel
    # segmented channel reduction / relayout that isn't worth the risk here.
    vmem_budget = _vmem_budget_bytes()
    row_in = groups * _padded_tile_bytes(c, l_pad, itemsize)   # 1 batch row, input dtype
    row_f32 = groups * _padded_tile_bytes(c, l_pad, 4)         # 1 batch row, f32
    # Per-step working set: double-buffered in + out blocks plus ~2 rows of
    # in-kernel f32 temporaries per batch row (xm product, dot reduce input).
    row_vmem = 4 * row_in + 2 * row_f32
    tb = max(1, vmem_budget // row_vmem)

    # Keep >= 2 grid steps per TensorCore: >= 4 steps total covers v7x
    # megacore sharding as well as single-core pipelining on v5e/v6e.
    min_steps = min(b, 4)
    tb = min(tb, pl.cdiv(b, min_steps))

    grid_n = pl.cdiv(b, tb)
    b_pad = grid_n * tb
    if b_pad != b:
        # Zero padding is numerically safe: var=0 -> std=1e-5 -> norm=0 -> out=0.
        x4 = jnp.pad(x4, ((0, b_pad - b), (0, 0), (0, 0), (0, 0)))

    kernel = functools.partial(
        _group_enhance_kernel,
        inv_len=1.0 / l, inv_len_m1=1.0 / (l - 1), valid_len=l)

    out = pl.pallas_call(
        kernel,
        out_shape=jax.ShapeDtypeStruct((b_pad, groups, c, l_pad), x.dtype),
        grid=(grid_n,),
        in_specs=[
            pl.BlockSpec((tb, groups, c, l_pad), lambda i: (i, 0, 0, 0)),   # x
            pl.BlockSpec((1, groups, 1, 1), lambda i: (0, 0, 0, 0)),        # weight
            pl.BlockSpec((1, groups, 1, 1), lambda i: (0, 0, 0, 0)),        # bias
        ],
        out_specs=pl.BlockSpec((tb, groups, c, l_pad), lambda i: (i, 0, 0, 0)),
        compiler_params=pltpu.CompilerParams(
            dimension_semantics=("parallel",),
            vmem_limit_bytes=int(vmem_budget),
        ),
        cost_estimate=pl.CostEstimate(
            flops=6 * b * f * l,
            transcendentals=b * groups * l,
            bytes_accessed=2 * b * f * l * itemsize,
        ),
    )(x4, w, bi)

    if b_pad != b:
        out = out[:b]
    if l_pad != l:
        out = out[..., :l]
    return out.reshape(b, f, l)


def group_enhance_ref(x, weight, bias, groups=5):
    """Pure-JAX reference mirroring the PyTorch forward (hyper_training=False)."""
    b, f, l = x.shape
    c = f // groups
    xg = x.astype(jnp.float32).reshape(b * groups, c, l)
    dot = (xg * xg.mean(axis=2, keepdims=True)).sum(axis=1, keepdims=True)
    norm = dot.reshape(b * groups, l)
    norm = norm - norm.mean(axis=1, keepdims=True)
    std = jnp.std(norm, axis=1, keepdims=True, ddof=1) + 1e-5
    norm = norm / std
    norm = (norm.reshape(b, groups, l) * weight.reshape(1, groups, 1)
            + bias.reshape(1, groups, 1))
    norm = norm.reshape(b * groups, 1, l)
    out = xg * jax.nn.sigmoid(norm)
    return out.reshape(b, f, l).astype(x.dtype)


if __name__ == "__main__":
    GROUPS = 5
    key = jax.random.PRNGKey(0)
    kx, kw, kb, kx2 = jax.random.split(key, 4)

    # Module init is weight=zeros, bias=ones; use small deterministic nonzero
    # values instead so the full normalization path is actually exercised.
    weight = 0.1 * jax.random.normal(kw, (1, GROUPS, 1), dtype=jnp.float32)
    bias = 1.0 + 0.1 * jax.random.normal(kb, (1, GROUPS, 1), dtype=jnp.float32)

    # Case 1: f32 input, lane-dense l (fast path, no padding).
    B, F, L = 2, 20, 128
    x = jax.random.normal(kx, (B, F, L), dtype=jnp.float32)
    out = jax.block_until_ready(group_enhance(x, weight, bias, groups=GROUPS))
    ref = jax.block_until_ready(group_enhance_ref(x, weight, bias, groups=GROUPS))
    assert out.shape == (B, F, L) and out.dtype == jnp.float32
    assert jnp.allclose(out, ref, atol=1e-5, rtol=1e-5), "f32 mismatch vs reference"

    # Case 2: bf16 input, l not a multiple of 128, b not a multiple of the
    # block size (exercises lane padding + batch padding + f32-stat paths).
    B2, F2, L2 = 5, 20, 96
    x2 = jax.random.normal(kx2, (B2, F2, L2), dtype=jnp.float32).astype(jnp.bfloat16)
    out2 = jax.block_until_ready(group_enhance(x2, weight, bias, groups=GROUPS))
    ref2 = jax.block_until_ready(group_enhance_ref(x2, weight, bias, groups=GROUPS))
    assert out2.shape == (B2, F2, L2) and out2.dtype == jnp.bfloat16
    assert jnp.allclose(out2.astype(jnp.float32), ref2.astype(jnp.float32),
                        atol=5e-2, rtol=5e-2), "bf16 mismatch vs reference"

    print("KERNEL_OK")
</pallas_src>

<mosaic_0001>
module attributes {stable_mosaic.version = 11 : i64} {
  func.func @_group_enhance_kernel(%arg0: i32, %arg1: memref<1x5x4x128xf32, #tpu.memory_space<vmem>>, %arg2: memref<1x5x1x1xf32, #tpu.memory_space<vmem>>, %arg3: memref<1x5x1x1xf32, #tpu.memory_space<vmem>>, %arg4: memref<1x5x4x128xf32, #tpu.memory_space<vmem>>) attributes {dimension_semantics = [#tpu.dimension_semantics<parallel>], iteration_bounds = array<i64: 2>, scalar_prefetch = 0 : i64, scratch_operands = 0 : i64, tpu.core_type = #tpu.core_type<tc>, window_params = [{transform_indices = @transform_0, window_bounds = array<i64: 1, 5, 4, 128>}, {pipeline_mode = #tpu.pipeline_mode<synchronous>, transform_indices = @transform_1, window_bounds = array<i64: 1, 5, 1, 1>}, {pipeline_mode = #tpu.pipeline_mode<synchronous>, transform_indices = @transform_2, window_bounds = array<i64: 1, 5, 1, 1>}, {transform_indices = @transform_3, window_bounds = array<i64: 1, 5, 4, 128>}]} {
    %c0 = arith.constant 0 : index
    %c0_0 = arith.constant 0 : index
    %c0_1 = arith.constant 0 : index
    %c0_2 = arith.constant 0 : index
    %0 = vector.load %arg1[%c0, %c0_0, %c0_1, %c0_2] : memref<1x5x4x128xf32, #tpu.memory_space<vmem>>, vector<1x5x4x128xf32>
    %cst = arith.constant dense<0.000000e+00> : vector<1x5x4xf32>
    %1 = vector.multi_reduction <add>, %0, %cst [3] : vector<1x5x4x128xf32> to vector<1x5x4xf32>
    %2 = vector.shape_cast %1 : vector<1x5x4xf32> to vector<1x5x4x1xf32>
    %cst_3 = arith.constant 7.812500e-03 : f32
    %3 = vector.broadcast %cst_3 : f32 to vector<1x5x4x1xf32>
    %4 = arith.mulf %2, %3 : vector<1x5x4x1xf32>
    %5 = vector.broadcast %4 : vector<1x5x4x1xf32> to vector<1x5x4x128xf32>
    %6 = arith.mulf %0, %5 : vector<1x5x4x128xf32>
    %cst_4 = arith.constant dense<0.000000e+00> : vector<1x5x128xf32>
    %7 = vector.multi_reduction <add>, %6, %cst_4 [2] : vector<1x5x4x128xf32> to vector<1x5x128xf32>
    %8 = vector.shape_cast %7 : vector<1x5x128xf32> to vector<1x5x1x128xf32>
    %cst_5 = arith.constant dense<0.000000e+00> : vector<1x5x1xf32>
    %9 = vector.multi_reduction <add>, %8, %cst_5 [3] : vector<1x5x1x128xf32> to vector<1x5x1xf32>
    %10 = vector.shape_cast %9 : vector<1x5x1xf32> to vector<1x5x1x1xf32>
    %cst_6 = arith.constant 7.812500e-03 : f32
    %11 = vector.broadcast %cst_6 : f32 to vector<1x5x1x1xf32>
    %12 = arith.mulf %10, %11 : vector<1x5x1x1xf32>
    %13 = vector.broadcast %12 : vector<1x5x1x1xf32> to vector<1x5x1x128xf32>
    %14 = arith.subf %8, %13 : vector<1x5x1x128xf32>
    %15 = arith.mulf %14, %14 : vector<1x5x1x128xf32>
    %cst_7 = arith.constant dense<0.000000e+00> : vector<1x5x1xf32>
    %16 = vector.multi_reduction <add>, %15, %cst_7 [3] : vector<1x5x1x128xf32> to vector<1x5x1xf32>
    %17 = vector.shape_cast %16 : vector<1x5x1xf32> to vector<1x5x1x1xf32>
    %cst_8 = arith.constant 0.00787401571 : f32
    %18 = vector.broadcast %cst_8 : f32 to vector<1x5x1x1xf32>
    %19 = arith.mulf %17, %18 : vector<1x5x1x1xf32>
    %20 = math.sqrt %19 : vector<1x5x1x1xf32>
    %cst_9 = arith.constant 9.99999974E-6 : f32
    %21 = vector.broadcast %cst_9 : f32 to vector<1x5x1x1xf32>
    %22 = arith.addf %20, %21 : vector<1x5x1x1xf32>
    %cst_10 = arith.constant 1.000000e+00 : f32
    %23 = vector.broadcast %cst_10 : f32 to vector<1x5x1x1xf32>
    %24 = arith.divf %23, %22 : vector<1x5x1x1xf32>
    %25 = vector.broadcast %24 : vector<1x5x1x1xf32> to vector<1x5x1x128xf32>
    %26 = arith.mulf %14, %25 : vector<1x5x1x128xf32>
    %c0_11 = arith.constant 0 : index
    %c0_12 = arith.constant 0 : index
    %c0_13 = arith.constant 0 : index
    %c0_14 = arith.constant 0 : index
    %27 = vector.load %arg2[%c0_11, %c0_12, %c0_13, %c0_14] : memref<1x5x1x1xf32, #tpu.memory_space<vmem>>, vector<1x5x1x1xf32>
    %28 = vector.broadcast %27 : vector<1x5x1x1xf32> to vector<1x5x1x128xf32>
    %29 = arith.mulf %26, %28 : vector<1x5x1x128xf32>
    %c0_15 = arith.constant 0 : index
    %c0_16 = arith.constant 0 : index
    %c0_17 = arith.constant 0 : index
    %c0_18 = arith.constant 0 : index
    %30 = vector.load %arg3[%c0_15, %c0_16, %c0_17, %c0_18] : memref<1x5x1x1xf32, #tpu.memory_space<vmem>>, vector<1x5x1x1xf32>
    %31 = vector.broadcast %30 : vector<1x5x1x1xf32> to vector<1x5x1x128xf32>
    %32 = arith.addf %29, %31 : vector<1x5x1x128xf32>
    %33 = arith.negf %32 : vector<1x5x1x128xf32>
    %34 = math.exp %33 : vector<1x5x1x128xf32>
    %cst_19 = arith.constant 1.000000e+00 : f32
    %35 = vector.broadcast %cst_19 : f32 to vector<1x5x1x128xf32>
    %36 = arith.addf %35, %34 : vector<1x5x1x128xf32>
    %37 = arith.divf %35, %36 : vector<1x5x1x128xf32>
    %38 = vector.broadcast %37 : vector<1x5x1x128xf32> to vector<1x5x4x128xf32>
    %39 = arith.mulf %0, %38 : vector<1x5x4x128xf32>
    %c0_20 = arith.constant 0 : index
    %c0_21 = arith.constant 0 : index
    %c0_22 = arith.constant 0 : index
    %c0_23 = arith.constant 0 : index
    %40 = vector.load %arg4[%c0_20, %c0_21, %c0_22, %c0_23] : memref<1x5x4x128xf32, #tpu.memory_space<vmem>>, vector<1x5x4x128xf32>
    tpu.vector_store %arg4[%c0_20, %c0_21, %c0_22, %c0_23], %39 {strides = array<i32>} : memref<1x5x4x128xf32, #tpu.memory_space<vmem>>, vector<1x5x4x128xf32>,
    return
  }
  func.func @transform_0(%arg0: i32) -> (i32, i32, i32, i32) {
    %c0_i32 = arith.constant 0 : i32
    %c0_i32_0 = arith.constant 0 : i32
    %c0_i32_1 = arith.constant 0 : i32
    %c0_i32_2 = arith.constant 0 : i32
    return %arg0, %c0_i32, %c0_i32_0, %c0_i32_1 : i32, i32, i32, i32
  }
  func.func @transform_1(%arg0: i32) -> (i32, i32, i32, i32) {
    %c0_i32 = arith.constant 0 : i32
    %c0_i32_0 = arith.constant 0 : i32
    %c0_i32_1 = arith.constant 0 : i32
    %c0_i32_2 = arith.constant 0 : i32
    %c0_i32_3 = arith.constant 0 : i32
    return %c0_i32, %c0_i32_0, %c0_i32_1, %c0_i32_2 : i32, i32, i32, i32
  }
  func.func @transform_2(%arg0: i32) -> (i32, i32, i32, i32) {
    %c0_i32 = arith.constant 0 : i32
    %c0_i32_0 = arith.constant 0 : i32
    %c0_i32_1 = arith.constant 0 : i32
    %c0_i32_2 = arith.constant 0 : i32
    %c0_i32_3 = arith.constant 0 : i32
    return %c0_i32, %c0_i32_0, %c0_i32_1, %c0_i32_2 : i32, i32, i32, i32
  }
  func.func @transform_3(%arg0: i32) -> (i32, i32, i32, i32) {
    %c0_i32 = arith.constant 0 : i32
    %c0_i32_0 = arith.constant 0 : i32
    %c0_i32_1 = arith.constant 0 : i32
    %c0_i32_2 = arith.constant 0 : i32
    return %arg0, %c0_i32, %c0_i32_0, %c0_i32_1 : i32, i32, i32, i32
  }
}

</mosaic_0001>

<llo_original>
// kernel: tpu_custom_call.1
$region0: #{tpu_custom_call.1}
  #allocation0 [shape = 'u32[]', space=smem, size = 0x4, offset = 0x4, fixed_abs, tag = 'smem constant byte address 0x4 - core index']
  #allocation1 [shape = 'u32[144,128]{1,0:T(1,128)}', space=vmem, size = 0x12000, scoped, tag = 'internal scratch']
  %s0 = inlined_call_operand.hbm [shape: f32[2,5,4,128], index: 0, kind: input, shape index: {}]
  %s1 = inlined_call_operand.vmem [shape: f32[1,5,1,1], index: 1, kind: input, shape index: {}]
  %s2 = inlined_call_operand.vmem [shape: f32[1,5,1,1], index: 2, kind: input, shape index: {}]
  %s3 = inlined_call_operand.hbm [shape: f32[2,5,4,128], index: 3, kind: output, shape index: {}]
  %s4 = sld [smem:[#allocation0]]
  $region49: #{tpu_custom_call.1} parent=0
    _
  %s6 = ssub.s32 1, %s4
  %s7 = scalar_select 0, %s6, %s4
  $region1: #{tpu_custom_call.1} parent=0
    #allocation2 [shape = 'u8[20480]{0}', space=vmem, size = 0x5000, scoped, tag = 'input window, operand 0']
    #allocation3 [shape = 's32[2]{0}', space=sflag, size = 0x8, scoped, tag = 'scoped memory for tpu_custom_call.1']
    #allocation4 [shape = 's32[2]{0}', space=sflag, size = 0x8, scoped, tag = 'scoped memory for tpu_custom_call.1']
    #allocation5 [shape = 'u8[20480]{0}', space=vmem, size = 0x5000, scoped, tag = 'output window, operand 0']
    %8 = vsyncpa [#allocation3], 0
    %s9 = scalar_lea.sflag [#allocation3], 1
    %10 = vsyncpa %s9, 0
    %11 = vsyncpa [#allocation4], 0
    %s12 = scalar_lea.sflag [#allocation4], 1
    %13 = vsyncpa %s12, 0
    loop: start=0, step=1, limit=4
    $region2: #{tpu_custom_call.1} parent=1 // loop_pre_header
      _
    $region3: #{tpu_custom_call.1} parent=1 // loop_header
      %s15 = sphi 0, %s19
      %p16 = scmp.ge.s32.totalorder %s15, 4
      %s25 = sphi 0, %s27
      %s28 = sphi 0, %s25
      %s29 = sphi 0, %s28
      %s45 = sphi 0, %s29
      %s49 = sphi 0, %s49
      %s51 = sphi 0, %s49
      %s52 = sphi 0, %s51
      %s66 = sphi 0, %s52
      %s70 = sphi 0, %s70
      %s72 = sphi 0, %s70
      %s73 = sphi 0, %s72
      %s87 = sphi 0, %s73
      %s93 = sphi 0, %s95
      %s96 = sphi 0, %s93
      %s97 = sphi 0, %s96
      %s113 = sphi 0, %s97
    $region4: #{tpu_custom_call.1} parent=1 // loop_header_branch
      %18 = sbr.rel (%p16) target = $region8
    $region5: #{tpu_custom_call.1} parent=1 // loop_body
      %s20 = ssub.s32 %s15, 1
      %s21 = ssub.s32 %s15, 2
      %s22 = sadd.s32 %s15, 1
      %s23 = ssub.s32 %s15, %s22
      %p24 = scmp.eq.s32.totalorder %s23, 0
      %s26 = sadd.s32 %s25, 1
      %s27 = scalar_select %p24, %s25, %s26
      %p30 = pneg %p24
      %p31 = scmp.eq.s32.totalorder %s15, 1
      %p32 = por %p30, %p31
      %p33 = scmp.ne.s32.totalorder %s25, %s28
      %p34 = scmp.eq.s32.totalorder %s15, 0
      %p35 = por %p33, %p34
      %p36 = scmp.ne.s32.totalorder %s25, %s28
      %p37 = scmp.eq.s32.totalorder %s20, 1
      %p38 = por %p36, %p37
      %p39 = scmp.ne.s32.totalorder %s28, %s29
      %p40 = scmp.eq.s32.totalorder %s20, 0
      %p41 = por %p39, %p40
      %p42 = scmp.ne.s32.totalorder %s28, %s29
      %p43 = scmp.eq.s32.totalorder %s21, 1
      %p44 = por %p42, %p43
      %p46 = scmp.ne.s32.totalorder %s29, %s45
      %p47 = scmp.eq.s32.totalorder %s21, 0
      %p48 = por %p46, %p47
      %s50 = sadd.s32 %s49, 1
      %p53 = scmp.eq.s32.totalorder %s15, 1
      %p54 = scmp.ne.s32.totalorder %s49, %s51
      %p55 = scmp.eq.s32.totalorder %s15, 0
      %p56 = por %p54, %p55
      %p57 = scmp.ne.s32.totalorder %s49, %s51
      %p58 = scmp.eq.s32.totalorder %s20, 1
      %p59 = por %p57, %p58
      %p60 = scmp.ne.s32.totalorder %s51, %s52
      %p61 = scmp.eq.s32.totalorder %s20, 0
      %p62 = por %p60, %p61
      %p63 = scmp.ne.s32.totalorder %s51, %s52
      %p64 = scmp.eq.s32.totalorder %s21, 1
      %p65 = por %p63, %p64
      %p67 = scmp.ne.s32.totalorder %s52, %s66
      %p68 = scmp.eq.s32.totalorder %s21, 0
      %p69 = por %p67, %p68
      %s71 = sadd.s32 %s70, 1
      %p74 = scmp.eq.s32.totalorder %s15, 1
      %p75 = scmp.ne.s32.totalorder %s70, %s72
      %p76 = scmp.eq.s32.totalorder %s15, 0
      %p77 = por %p75, %p76
      %p78 = scmp.ne.s32.totalorder %s70, %s72
      %p79 = scmp.eq.s32.totalorder %s20, 1
      %p80 = por %p78, %p79
      %p81 = scmp.ne.s32.totalorder %s72, %s73
      %p82 = scmp.eq.s32.totalorder %s20, 0
      %p83 = por %p81, %p82
      %p84 = scmp.ne.s32.totalorder %s72, %s73
      %p85 = scmp.eq.s32.totalorder %s21, 1
      %p86 = por %p84, %p85
      %p88 = scmp.ne.s32.totalorder %s73, %s87
      %p89 = scmp.eq.s32.totalorder %s21, 0
      %p90 = por %p88, %p89
      %s91 = ssub.s32 %s15, %s22
      %p92 = scmp.eq.s32.totalorder %s91, 0
      %s94 = sadd.s32 %s93, 1
      %s95 = scalar_select %p92, %s93, %s94
      %p98 = pneg %p92
      %p99 = scmp.eq.s32.totalorder %s15, 1
      %p100 = por %p98, %p99
      %p101 = scmp.ne.s32.totalorder %s93, %s96
      %p102 = scmp.eq.s32.totalorder %s15, 0
      %p103 = por %p101, %p102
      %p104 = scmp.ne.s32.totalorder %s93, %s96
      %p105 = scmp.eq.s32.totalorder %s20, 1
      %p106 = por %p104, %p105
      %p107 = scmp.ne.s32.totalorder %s96, %s97
      %p108 = scmp.eq.s32.totalorder %s20, 0
      %p109 = por %p107, %p108
      %p110 = scmp.ne.s32.totalorder %s96, %s97
      %p111 = scmp.eq.s32.totalorder %s21, 1
      %p112 = por %p110, %p111
      %p114 = scmp.ne.s32.totalorder %s97, %s113
      %p115 = scmp.eq.s32.totalorder %s21, 0
      %p116 = por %p114, %p115
      %p117 = scmp.le.s32.totalorder 1, %s15
      %p118 = scmp.lt.s32.totalorder %s15, 3
      %p119 = pnand %p117, %p118
      %p120 = pneg %p119
      // Predicated region
      $region9: #{tpu_custom_call.1} parent=5 // pred_check
        _
      $region10: #{tpu_custom_call.1} parent=5 // pred_check_branch
        %122 = sbr.rel (%p119) target = $region12
      $region11: #{tpu_custom_call.1} parent=5 // pred_region
        %s123 = ssub.s32 %s15, 1
        // Predicated region
        $region13: #{tpu_custom_call.1} parent=11 // pred_check
          %p124 = pneg %p62
        $region14: #{tpu_custom_call.1} parent=11 // pred_check_branch
          %126 = sbr.rel (%p124) target = $region16
        $region15: #{tpu_custom_call.1} parent=11 // pred_region
          _
        $region16: #{tpu_custom_call.1} parent=11 // pred_fallthru
          _
        // Predicated region
        $region17: #{tpu_custom_call.1} parent=11 // pred_check
          %p127 = pneg %p83
        $region18: #{tpu_custom_call.1} parent=11 // pred_check_branch
          %129 = sbr.rel (%p127) target = $region20
        $region19: #{tpu_custom_call.1} parent=11 // pred_region
          _
        $region20: #{tpu_custom_call.1} parent=11 // pred_fallthru
          _
      $region12: #{tpu_custom_call.1} parent=5 // pred_fallthru
        _
      %p130 = scmp.lt.s32.totalorder %s15, 2
      // Predicated region
      $region21: #{tpu_custom_call.1} parent=5 // pred_check
        %p131 = pneg %p130
      $region22: #{tpu_custom_call.1} parent=5 // pred_check_branch
        %133 = sbr.rel (%p131) target = $region24
      $region23: #{tpu_custom_call.1} parent=5 // pred_region
        // Predicated region
        $region25: #{tpu_custom_call.1} parent=23 // pred_check
          %p134 = pneg %p35
        $region26: #{tpu_custom_call.1} parent=23 // pred_check_branch
          %136 = sbr.rel (%p134) target = $region28
        $region27: #{tpu_custom_call.1} parent=23 // pred_region
          %s137 = sand.u32 %s25, 1
          %s138 = scalar_lea.sflag [#allocation3], %s137
          %s139 = sand.u32 %s25, 1
          %s140 = smul.addr %s139, 20
          %s141 = scalar_lea.vmem [#allocation2], %s140
          %s143 = ssub.s32 320, 320
          %144 = vsyncadd %s138, %s143
          %s145 = smul.addr %s15, 5
          %s146 = smul.addr %s145, 64
          %s147 = scalar_lea.hbm %s0, %s146
          %s148 = sshll.u32 %s141, 4
          %s149 = int_to_ptr.vmem [resolvable:$true] %s148
          %154 = dma.hbm_to_vmem [thread:$0]  %s147, 320, %s149, %s138, 64, 64, 4
        $region28: #{tpu_custom_call.1} parent=23 // pred_fallthru
          _
      $region24: #{tpu_custom_call.1} parent=5 // pred_fallthru
        _
      %p155 = scmp.le.s32.totalorder 1, %s15
      %p156 = scmp.lt.s32.totalorder %s15, 3
      %p157 = pnand %p155, %p156
      %p158 = pneg %p157
      // Predicated region
      $region29: #{tpu_custom_call.1} parent=5 // pred_check
        _
      $region30: #{tpu_custom_call.1} parent=5 // pred_check_branch
        %160 = sbr.rel (%p157) target = $region32
      $region31: #{tpu_custom_call.1} parent=5 // pred_region
        %s161 = ssub.s32 %s15, 1
        %s162 = sand.u32 %s28, 1
        %s163 = scalar_lea.sflag [#allocation3], %s162
        %s164 = sand.u32 %s28, 1
        %s165 = smul.addr %s164, 20
        %s166 = scalar_lea.vmem [#allocation2], %s165
        // Predicated region
        $region33: #{tpu_custom_call.1} parent=31 // pred_check
          %p167 = pneg %p41
        $region34: #{tpu_custom_call.1} parent=31 // pred_check_branch
          %169 = sbr.rel (%p167) target = $region36
        $region35: #{tpu_custom_call.1} parent=31 // pred_region
          %170 = dma.done %s163, 320
        $region36: #{tpu_custom_call.1} parent=31 // pred_fallthru
          _
        %s171 = sand.u32 %s28, 1
        %s172 = scalar_lea.sflag [#allocation3], %s171
        %s173 = sand.u32 %s28, 1
        %s174 = smul.addr %s173, 20
        %s175 = scalar_lea.vmem [#allocation2], %s174
        %p176 = pneg %p41
        %p177 = pneg %p38
        %p178 = pneg %p62
        %p179 = pneg %p59
        %p180 = pneg %p83
        %p181 = pneg %p80
        %p182 = pneg %p109
        %p183 = pneg %p106
        %s184 = sand.u32 %s96, 1
        %s185 = scalar_lea.sflag [#allocation4], %s184
        %s186 = sand.u32 %s96, 1
        %s187 = smul.addr %s186, 20
        %s188 = scalar_lea.vmem [#allocation5], %s187
        %v189 = vld [vmem:[%s166] sm:$0xf]
        %v190 = vld [vmem:[%s166 + $0x4] sm:$0xf]
        %v191 = vld [vmem:[%s166 + $0x8] sm:$0xf]
        %v192 = vld [vmem:[%s166 + $0xc] sm:$0xf]
        %v193 = vld [vmem:[%s166 + $0x10] sm:$0xf]
        %vm194 = vcmask 1043456
        %v195 = vsel %vm194, %v189, 0.0
        %196 = vadd.xlane.f32.xlu0 %v195
        %v197 = vpop.xlane.xlu0 %196
        %v198 = vsel %vm194, %v190, 0.0
        %199 = vadd.xlane.f32.xlu0 %v198
        %v200 = vpop.xlane.xlu0 %199
        %v201 = vsel %vm194, %v191, 0.0
        %202 = vadd.xlane.f32.xlu0 %v201
        %v203 = vpop.xlane.xlu0 %202
        %v204 = vsel %vm194, %v192, 0.0
        %205 = vadd.xlane.f32.xlu0 %v204
        %v206 = vpop.xlane.xlu0 %205
        %v207 = vsel %vm194, %v193, 0.0
        %208 = vadd.xlane.f32.xlu0 %v207
        %v209 = vpop.xlane.xlu0 %208
        %v210 = vmul.f32 %v197, 0.0078125
        %v211 = vmul.f32 %v200, 0.0078125
        %v212 = vmul.f32 %v203, 0.0078125
        %v213 = vmul.f32 %v206, 0.0078125
        %v214 = vmul.f32 %v209, 0.0078125
        %v215 = vmul.f32 %v189, %v210
        %v216 = vmul.f32 %v190, %v211
        %v217 = vmul.f32 %v191, %v212
        %v218 = vmul.f32 %v192, %v213
        %v219 = vmul.f32 %v193, %v214
        %v220 = vsel %vm194, %v215, 0.0
        %v221 = vrot.slane %v220, 4
        %v222 = vadd.f32 %v220, %v221
        %v223 = vrot.slane %v222, 2
        %v224 = vadd.f32 %v222, %v223
        %v225 = vrot.slane %v224, 1
        %v226 = vadd.f32 %v224, %v225
        %v227 = vsel %vm194, %v216, 0.0
        %v228 = vrot.slane %v227, 4
        %v229 = vadd.f32 %v227, %v228
        %v230 = vrot.slane %v229, 2
        %v231 = vadd.f32 %v229, %v230
        %v232 = vrot.slane %v231, 1
        %v233 = vadd.f32 %v231, %v232
        %v234 = vsel %vm194, %v217, 0.0
        %v235 = vrot.slane %v234, 4
        %v236 = vadd.f32 %v234, %v235
        %v237 = vrot.slane %v236, 2
        %v238 = vadd.f32 %v236, %v237
        %v239 = vrot.slane %v238, 1
        %v240 = vadd.f32 %v238, %v239
        %v241 = vsel %vm194, %v218, 0.0
        %v242 = vrot.slane %v241, 4
        %v243 = vadd.f32 %v241, %v242
        %v244 = vrot.slane %v243, 2
        %v245 = vadd.f32 %v243, %v244
        %v246 = vrot.slane %v245, 1
        %v247 = vadd.f32 %v245, %v246
        %v248 = vsel %vm194, %v219, 0.0
        %v249 = vrot.slane %v248, 4
        %v250 = vadd.f32 %v248, %v249
        %v251 = vrot.slane %v250, 2
        %v252 = vadd.f32 %v250, %v251
        %v253 = vrot.slane %v252, 1
        %v254 = vadd.f32 %v252, %v253
        %255 = vadd.xlane.f32.xlu0 %v226
        %v256 = vpop.xlane.xlu0 %255
        %257 = vadd.xlane.f32.xlu0 %v233
        %v258 = vpop.xlane.xlu0 %257
        %259 = vadd.xlane.f32.xlu0 %v240
        %v260 = vpop.xlane.xlu0 %259
        %261 = vadd.xlane.f32.xlu0 %v247
        %v262 = vpop.xlane.xlu0 %261
        %263 = vadd.xlane.f32.xlu0 %v254
        %v264 = vpop.xlane.xlu0 %263
        %v265 = vmul.f32 %v256, 0.0078125
        %v266 = vmul.f32 %v258, 0.0078125
        %v267 = vmul.f32 %v260, 0.0078125
        %v268 = vmul.f32 %v262, 0.0078125
        %v269 = vmul.f32 %v264, 0.0078125
        %v270 = vsub.f32 %v226, %v265
        %v271 = vsub.f32 %v233, %v266
        %v272 = vsub.f32 %v240, %v267
        %v273 = vsub.f32 %v247, %v268
        %v274 = vsub.f32 %v254, %v269
        %v275 = vmul.f32 %v270, %v270
        %v276 = vmul.f32 %v271, %v271
        %v277 = vmul.f32 %v272, %v272
        %v278 = vmul.f32 %v273, %v273
        %v279 = vmul.f32 %v274, %v274
        %280 = vadd.xlane.f32.xlu0 %v275
        %v281 = vpop.xlane.xlu0 %280
        %282 = vadd.xlane.f32.xlu0 %v276
        %v283 = vpop.xlane.xlu0 %282
        %284 = vadd.xlane.f32.xlu0 %v277
        %v285 = vpop.xlane.xlu0 %284
        %286 = vadd.xlane.f32.xlu0 %v278
        %v287 = vpop.xlane.xlu0 %286
        %288 = vadd.xlane.f32.xlu0 %v279
        %v289 = vpop.xlane.xlu0 %288
        %v290 = vmul.f32 %v281, 0.007874016
        %v291 = vmul.f32 %v283, 0.007874016
        %v292 = vmul.f32 %v285, 0.007874016
        %v293 = vmul.f32 %v287, 0.007874016
        %v294 = vmul.f32 %v289, 0.007874016
        %v295 = vrsqrt.pop %v290
        %v296 = vmul.f32 %v290, %v295
        %vm297 = vcmp.eq.f32.partialorder %v290, inf
        %v298 = vsel %vm297, %v290, %v296
        %vm299 = vcmp.eq.f32.partialorder %v290, 0.0
        %v300 = vand.u32 %v290, 2147483648
        %v301 = vsel %vm299, %v300, %v298
        %v302 = vrsqrt.pop %v291
        %v303 = vmul.f32 %v291, %v302
        %vm304 = vcmp.eq.f32.partialorder %v291, inf
        %v305 = vsel %vm304, %v291, %v303
        %vm306 = vcmp.eq.f32.partialorder %v291, 0.0
        %v307 = vand.u32 %v291, 2147483648
        %v308 = vsel %vm306, %v307, %v305
        %v309 = vrsqrt.pop %v292
        %v310 = vmul.f32 %v292, %v309
        %vm311 = vcmp.eq.f32.partialorder %v292, inf
        %v312 = vsel %vm311, %v292, %v310
        %vm313 = vcmp.eq.f32.partialorder %v292, 0.0
        %v314 = vand.u32 %v292, 2147483648
        %v315 = vsel %vm313, %v314, %v312
        %v316 = vrsqrt.pop %v293
        %v317 = vmul.f32 %v293, %v316
        %vm318 = vcmp.eq.f32.partialorder %v293, inf
        %v319 = vsel %vm318, %v293, %v317
        %vm320 = vcmp.eq.f32.partialorder %v293, 0.0
        %v321 = vand.u32 %v293, 2147483648
        %v322 = vsel %vm320, %v321, %v319
        %v323 = vrsqrt.pop %v294
        %v324 = vmul.f32 %v294, %v323
        %vm325 = vcmp.eq.f32.partialorder %v294, inf
        %v326 = vsel %vm325, %v294, %v324
        %vm327 = vcmp.eq.f32.partialorder %v294, 0.0
        %v328 = vand.u32 %v294, 2147483648
        %v329 = vsel %vm327, %v328, %v326
        %v330 = vadd.f32 %v301, 1e-05
        %v331 = vadd.f32 %v308, 1e-05
        %v332 = vadd.f32 %v315, 1e-05
        %v333 = vadd.f32 %v322, 1e-05
        %v334 = vadd.f32 %v329, 1e-05
        %v335 = vrcp.pop %v330
        %v336 = vmul.f32 1.0, %v335
        %v337 = vrcp.pop %v331
        %v338 = vmul.f32 1.0, %v337
        %v339 = vrcp.pop %v332
        %v340 = vmul.f32 1.0, %v339
        %v341 = vrcp.pop %v333
        %v342 = vmul.f32 1.0, %v341
        %v343 = vrcp.pop %v334
        %v344 = vmul.f32 1.0, %v343
        %v345 = vmul.f32 %v270, %v336
        %v346 = vmul.f32 %v271, %v338
        %v347 = vmul.f32 %v272, %v340
        %v348 = vmul.f32 %v273, %v342
        %v349 = vmul.f32 %v274, %v344
        %v350 = vld [vmem:[%s1] sm:$0x1]
        %v351 = vld [vmem:[%s1 + $0x1] sm:$0x1]
        %v352 = vld [vmem:[%s1 + $0x2] sm:$0x1]
        %v353 = vld [vmem:[%s1 + $0x3] sm:$0x1]
        %v354 = vld [vmem:[%s1 + $0x4] sm:$0x1]
        %356 = vset.pattern.permute.xlu0 0
        %357 = vperm.xlu0 %356, %v350
        %v358 = vpop.permute.xlu0 %357
        %v360 = vlaneseq
        %v361 = vshrl.u32 %v360, 7
        %v362 = vsub.s32 0, %v361
        %v363 = vrot.slane %v358, %v362
        %365 = vset.pattern.permute.xlu0 0
        %366 = vperm.xlu0 %365, %v351
        %v367 = vpop.permute.xlu0 %366
        %v369 = vlaneseq
        %v370 = vshrl.u32 %v369, 7
        %v371 = vsub.s32 0, %v370
        %v372 = vrot.slane %v367, %v371
        %374 = vset.pattern.permute.xlu0 0
        %375 = vperm.xlu0 %374, %v352
        %v376 = vpop.permute.xlu0 %375
        %v378 = vlaneseq
        %v379 = vshrl.u32 %v378, 7
        %v380 = vsub.s32 0, %v379
        %v381 = vrot.slane %v376, %v380
        %383 = vset.pattern.permute.xlu0 0
        %384 = vperm.xlu0 %383, %v353
        %v385 = vpop.permute.xlu0 %384
        %v387 = vlaneseq
        %v388 = vshrl.u32 %v387, 7
        %v389 = vsub.s32 0, %v388
        %v390 = vrot.slane %v385, %v389
        %392 = vset.pattern.permute.xlu0 0
        %393 = vperm.xlu0 %392, %v354
        %v394 = vpop.permute.xlu0 %393
        %v396 = vlaneseq
        %v397 = vshrl.u32 %v396, 7
        %v398 = vsub.s32 0, %v397
        %v399 = vrot.slane %v394, %v398
        %v400 = vmul.f32 %v345, %v363
        %v401 = vmul.f32 %v346, %v372
        %v402 = vmul.f32 %v347, %v381
        %v403 = vmul.f32 %v348, %v390
        %v404 = vmul.f32 %v349, %v399
        %v405 = vld [vmem:[%s2] sm:$0x1]
        %v406 = vld [vmem:[%s2 + $0x1] sm:$0x1]
        %v407 = vld [vmem:[%s2 + $0x2] sm:$0x1]
        %v408 = vld [vmem:[%s2 + $0x3] sm:$0x1]
        %v409 = vld [vmem:[%s2 + $0x4] sm:$0x1]
        %411 = vset.pattern.permute.xlu0 0
        %412 = vperm.xlu0 %411, %v405
        %v413 = vpop.permute.xlu0 %412
        %v415 = vlaneseq
        %v416 = vshrl.u32 %v415, 7
        %v417 = vsub.s32 0, %v416
        %v418 = vrot.slane %v413, %v417
        %420 = vset.pattern.permute.xlu0 0
        %421 = vperm.xlu0 %420, %v406
        %v422 = vpop.permute.xlu0 %421
        %v424 = vlaneseq
        %v425 = vshrl.u32 %v424, 7
        %v426 = vsub.s32 0, %v425
        %v427 = vrot.slane %v422, %v426
        %429 = vset.pattern.permute.xlu0 0
        %430 = vperm.xlu0 %429, %v407
        %v431 = vpop.permute.xlu0 %430
        %v433 = vlaneseq
        %v434 = vshrl.u32 %v433, 7
        %v435 = vsub.s32 0, %v434
        %v436 = vrot.slane %v431, %v435
        %438 = vset.pattern.permute.xlu0 0
        %439 = vperm.xlu0 %438, %v408
        %v440 = vpop.permute.xlu0 %439
        %v442 = vlaneseq
        %v443 = vshrl.u32 %v442, 7
        %v444 = vsub.s32 0, %v443
        %v445 = vrot.slane %v440, %v444
        %447 = vset.pattern.permute.xlu0 0
        %448 = vperm.xlu0 %447, %v409
        %v449 = vpop.permute.xlu0 %448
        %v451 = vlaneseq
        %v452 = vshrl.u32 %v451, 7
        %v453 = vsub.s32 0, %v452
        %v454 = vrot.slane %v449, %v453
        %v455 = vadd.f32 %v400, %v418
        %v456 = vadd.f32 %v401, %v427
        %v457 = vadd.f32 %v402, %v436
        %v458 = vadd.f32 %v403, %v445
        %v459 = vadd.f32 %v404, %v454
        %v460 = vxor.u32 %v455, 2147483648
        %v461 = vxor.u32 %v456, 2147483648
        %v462 = vxor.u32 %v457, 2147483648
        %v463 = vxor.u32 %v458, 2147483648
        %v464 = vxor.u32 %v459, 2147483648
        %v465 = vmul.f32 %v460, 1.442695
        %v466 = vpow.pop %v465
        %v467 = vmul.f32 %v461, 1.442695
        %v468 = vpow.pop %v467
        %v469 = vmul.f32 %v462, 1.442695
        %v470 = vpow.pop %v469
        %v471 = vmul.f32 %v463, 1.442695
        %v472 = vpow.pop %v471
        %v473 = vmul.f32 %v464, 1.442695
        %v474 = vpow.pop %v473
        %v475 = vadd.f32 %v466, 1.0
        %v476 = vadd.f32 %v468, 1.0
        %v477 = vadd.f32 %v470, 1.0
        %v478 = vadd.f32 %v472, 1.0
        %v479 = vadd.f32 %v474, 1.0
        %v480 = vrcp.pop %v475
        %v481 = vmul.f32 1.0, %v480
        %v482 = vrcp.pop %v476
        %v483 = vmul.f32 1.0, %v482
        %v484 = vrcp.pop %v477
        %v485 = vmul.f32 1.0, %v484
        %v486 = vrcp.pop %v478
        %v487 = vmul.f32 1.0, %v486
        %v488 = vrcp.pop %v479
        %v489 = vmul.f32 1.0, %v488
        %v490 = vmul.f32 %v189, %v481
        %v491 = vmul.f32 %v190, %v483
        %v492 = vmul.f32 %v191, %v485
        %v493 = vmul.f32 %v192, %v487
        %v494 = vmul.f32 %v193, %v489
        %495 = vst [vmem:[%s188] sm:$0xf] %v490
        %496 = vst [vmem:[%s188 + $0x4] sm:$0xf] %v491
        %497 = vst [vmem:[%s188 + $0x8] sm:$0xf] %v492
        %498 = vst [vmem:[%s188 + $0xc] sm:$0xf] %v493
        %499 = vst [vmem:[%s188 + $0x10] sm:$0xf] %v494
        %s500 = sand.u32 %s96, 1
        %s501 = scalar_lea.sflag [#allocation4], %s500
        %s502 = sand.u32 %s96, 1
        %s503 = smul.addr %s502, 20
        %s504 = scalar_lea.vmem [#allocation5], %s503
        // Predicated region
        $region37: #{tpu_custom_call.1} parent=31 // pred_check
          %p505 = pneg %p106
        $region38: #{tpu_custom_call.1} parent=31 // pred_check_branch
          %507 = sbr.rel (%p505) target = $region40
        $region39: #{tpu_custom_call.1} parent=31 // pred_region
          %s509 = ssub.s32 320, 320
          %510 = vsyncadd %s501, %s509
          %s511 = smul.addr %s20, 5
          %s512 = smul.addr %s511, 64
          %s513 = scalar_lea.hbm %s3, %s512
          %s514 = sshll.u32 %s504, 4
          %s515 = int_to_ptr.vmem [resolvable:$true] %s514
          %520 = dma.vmem_to_hbm [thread:$0]  %s515, 320, %s513, %s501, 64, 64, 4
        $region40: #{tpu_custom_call.1} parent=31 // pred_fallthru
          _
      $region32: #{tpu_custom_call.1} parent=5 // pred_fallthru
        _
      %p521 = scmp.le.s32.totalorder 2, %s15
      // Predicated region
      $region41: #{tpu_custom_call.1} parent=5 // pred_check
        %p522 = pneg %p521
      $region42: #{tpu_custom_call.1} parent=5 // pred_check_branch
        %524 = sbr.rel (%p522) target = $region44
      $region43: #{tpu_custom_call.1} parent=5 // pred_region
        %s525 = ssub.s32 %s15, 2
        // Predicated region
        $region45: #{tpu_custom_call.1} parent=43 // pred_check
          %p526 = pneg %p112
        $region46: #{tpu_custom_call.1} parent=43 // pred_check_branch
          %528 = sbr.rel (%p526) target = $region48
        $region47: #{tpu_custom_call.1} parent=43 // pred_region
          %s529 = sand.u32 %s97, 1
          %s530 = scalar_lea.sflag [#allocation4], %s529
          %s531 = sand.u32 %s97, 1
          %s532 = smul.addr %s531, 20
          %s533 = scalar_lea.vmem [#allocation5], %s532
          %534 = dma.done %s530, 320
        $region48: #{tpu_custom_call.1} parent=43 // pred_fallthru
          _
      $region44: #{tpu_custom_call.1} parent=5 // pred_fallthru
        _
    $region6: #{tpu_custom_call.1} parent=1 // loop_footer
      %s19 = sadd.s32 1, %s15
    $region7: #{tpu_custom_call.1} parent=1 // loop_footer_branch
      %14 = sbr.rel target = $region3
    $region8: #{tpu_custom_call.1} parent=1 // loop_exit
      _
    %535 = vsyncpa [#allocation3], 1
    %s536 = scalar_lea.sflag [#allocation3], 1
    %537 = vsyncpa %s536, 1
    %538 = vsyncpa [#allocation4], 1
    %s539 = scalar_lea.sflag [#allocation4], 1
    %540 = vsyncpa %s539, 1

</llo_original>
